<compile_context>
chip_gen: v6e
topology: v6e:2x2x1
jax: 0.10.0
libtpu: 0.0.40
codegen_flags: <defaults>
</compile_context>

<pallas_src>
import jax
import jax.numpy as jnp
from jax.experimental import pallas as pl
from jax.experimental.pallas import tpu as pltpu


def _msdex_kernel(x_ref, t_ref, s_ref, num_ref, den_ref):
    # x/t block: (BN, C, TH, W); s block: (BN, C//2, TH, W)
    x = x_ref[...].astype(jnp.float32)
    t = t_ref[...].astype(jnp.float32)
    s = s_ref[...].astype(jnp.float32)

    d = t - x
    sq = d * d
    cs = s.shape[1]  # C // 2 (static)
    # sem_label was torch.cat([sem, sem], dim=1): same mask on both channel halves.
    num = jnp.sum(s * (sq[:, :cs] + sq[:, cs:]))
    den = 2.0 * jnp.sum(s)

    num_ref[...] = num.reshape(1, 1, 1, 1)
    den_ref[...] = den.reshape(1, 1, 1, 1)


def _choose_tiles(N, C, H, W, itemsize):
    """Pick (block_n, block_h) keeping one input block around <= ~2 MiB."""
    max_elems = (2 << 20) // max(itemsize, 1)
    block_h = H
    if C * H * W > max_elems:
        for cand in range(min(H, 512), 7, -1):
            if H % cand == 0 and cand % 8 == 0 and C * cand * W <= max_elems:
                block_h = cand
                break
    block_n = 1
    if block_h == H:
        per_img = max(C * H * W, 1)
        block_n = max(1, min(N, max_elems // per_img))
        while N % block_n != 0:
            block_n -= 1
    return block_n, block_h


def msdex_loss(inputs, targets, sem_label, *, block_n=None, block_h=None):
    """inputs/targets: [N, C, H, W]; sem_label: [N, C//2, H, W]. Returns scalar f32."""
    N, C, H, W = inputs.shape
    assert targets.shape == inputs.shape
    Ns, Cs, Hs, Ws = sem_label.shape
    assert (Ns, Hs, Ws) == (N, H, W) and C == 2 * Cs, (inputs.shape, sem_label.shape)

    bn_auto, bh_auto = _choose_tiles(N, C, H, W, jnp.dtype(inputs.dtype).itemsize)
    bn = block_n if block_n is not None else bn_auto
    bh = block_h if block_h is not None else bh_auto
    assert N % bn == 0 and H % bh == 0, (bn, bh)
    gb, gh = N // bn, H // bh

    xt_spec = pl.BlockSpec((bn, C, bh, W), lambda b, h: (b, 0, h, 0))
    s_spec = pl.BlockSpec((bn, Cs, bh, W), lambda b, h: (b, 0, h, 0))
    part_spec = pl.BlockSpec((1, 1, 1, 1), lambda b, h: (b, h, 0, 0))

    num_p, den_p = pl.pallas_call(
        _msdex_kernel,
        out_shape=(
            jax.ShapeDtypeStruct((gb, gh, 1, 1), jnp.float32),
            jax.ShapeDtypeStruct((gb, gh, 1, 1), jnp.float32),
        ),
        grid_spec=pltpu.PrefetchScalarGridSpec(
            num_scalar_prefetch=0,
            grid=(gb, gh),
            in_specs=[xt_spec, xt_spec, s_spec],
            out_specs=[part_spec, part_spec],
        ),
        compiler_params=pltpu.CompilerParams(
            dimension_semantics=("parallel", "parallel"),
        ),
    )(inputs, targets, sem_label)

    # tiny final reduce + epsilon/divide: exactly once, in plain JAX
    return num_p.sum() / (den_p.sum() + 1e-8)


def _reference(inputs, targets, sem_label):
    sem = jnp.concatenate([sem_label, sem_label], axis=1).astype(jnp.float32)
    d = (targets - inputs).astype(jnp.float32)
    loss = sem * (d * d)
    return loss.sum() / (sem.sum() + 1e-8)


if __name__ == "__main__":
    key = jax.random.PRNGKey(0)
    k1, k2, k3 = jax.random.split(key, 3)
    # inputs/targets have 2x the channels of sem_label (the module concatenates
    # sem_label with itself along the channel axis before masking).
    N, C, H, W = 2, 4, 16, 16
    Cs = C // 2
    inputs = jax.random.normal(k1, (N, C, H, W), dtype=jnp.float32)
    targets = jax.random.normal(k2, (N, C, H, W), dtype=jnp.float32)
    sem_label = (jax.random.uniform(k3, (N, Cs, H, W)) > 0.5).astype(jnp.float32)

    loss = msdex_loss(inputs, targets, sem_label)
    jax.block_until_ready(loss)

    ref = _reference(inputs, targets, sem_label)
    assert jnp.allclose(loss, ref, rtol=1e-5, atol=1e-6), (loss, ref)
    print("KERNEL_OK")
</pallas_src>

<mosaic_0001>
module attributes {stable_mosaic.version = 11 : i64} {
  func.func @_msdex_kernel(%arg0: i32, %arg1: i32, %arg2: memref<2x4x16x16xf32, #tpu.memory_space<vmem>>, %arg3: memref<2x4x16x16xf32, #tpu.memory_space<vmem>>, %arg4: memref<2x2x16x16xf32, #tpu.memory_space<vmem>>, %arg5: memref<1x1x1x1xf32, #tpu.memory_space<vmem>>, %arg6: memref<1x1x1x1xf32, #tpu.memory_space<vmem>>) attributes {dimension_semantics = [#tpu.dimension_semantics<parallel>, #tpu.dimension_semantics<parallel>], iteration_bounds = array<i64: 1, 1>, scalar_prefetch = 0 : i64, scratch_operands = 0 : i64, tpu.core_type = #tpu.core_type<tc>, window_params = [{transform_indices = @transform_0, window_bounds = array<i64: 2, 4, 16, 16>}, {transform_indices = @transform_1, window_bounds = array<i64: 2, 4, 16, 16>}, {transform_indices = @transform_2, window_bounds = array<i64: 2, 2, 16, 16>}, {transform_indices = @transform_3, window_bounds = array<i64: 1, 1, 1, 1>}, {transform_indices = @transform_4, window_bounds = array<i64: 1, 1, 1, 1>}]} {
    %c0 = arith.constant 0 : index
    %c0_0 = arith.constant 0 : index
    %c0_1 = arith.constant 0 : index
    %c0_2 = arith.constant 0 : index
    %0 = vector.load %arg2[%c0, %c0_0, %c0_1, %c0_2] : memref<2x4x16x16xf32, #tpu.memory_space<vmem>>, vector<2x4x16x16xf32>
    %c0_3 = arith.constant 0 : index
    %c0_4 = arith.constant 0 : index
    %c0_5 = arith.constant 0 : index
    %c0_6 = arith.constant 0 : index
    %1 = vector.load %arg3[%c0_3, %c0_4, %c0_5, %c0_6] : memref<2x4x16x16xf32, #tpu.memory_space<vmem>>, vector<2x4x16x16xf32>
    %c0_7 = arith.constant 0 : index
    %c0_8 = arith.constant 0 : index
    %c0_9 = arith.constant 0 : index
    %c0_10 = arith.constant 0 : index
    %2 = vector.load %arg4[%c0_7, %c0_8, %c0_9, %c0_10] : memref<2x2x16x16xf32, #tpu.memory_space<vmem>>, vector<2x2x16x16xf32>
    %3 = arith.subf %1, %0 : vector<2x4x16x16xf32>
    %4 = arith.mulf %3, %3 : vector<2x4x16x16xf32>
    %5 = vector.extract_strided_slice %4 {offsets = [0, 0, 0, 0], sizes = [2, 2, 16, 16], strides = [1, 1, 1, 1]} : vector<2x4x16x16xf32> to vector<2x2x16x16xf32>
    %6 = vector.extract_strided_slice %4 {offsets = [0, 2, 0, 0], sizes = [2, 2, 16, 16], strides = [1, 1, 1, 1]} : vector<2x4x16x16xf32> to vector<2x2x16x16xf32>
    %7 = arith.addf %5, %6 : vector<2x2x16x16xf32>
    %8 = arith.mulf %2, %7 : vector<2x2x16x16xf32>
    %9 = vector.shape_cast %8 : vector<2x2x16x16xf32> to vector<1x2x2x16x16xf32>
    %cst = arith.constant dense<0.000000e+00> : vector<1xf32>
    %10 = vector.multi_reduction <add>, %9, %cst [1, 2, 3, 4] : vector<1x2x2x16x16xf32> to vector<1xf32>
    %11 = vector.shape_cast %10 : vector<1xf32> to vector<1x1x1x1x1xf32>
    %12 = vector.extract %11[0, 0, 0, 0, 0] : f32 from vector<1x1x1x1x1xf32>
    %13 = vector.shape_cast %2 : vector<2x2x16x16xf32> to vector<1x2x2x16x16xf32>
    %cst_11 = arith.constant dense<0.000000e+00> : vector<1xf32>
    %14 = vector.multi_reduction <add>, %13, %cst_11 [1, 2, 3, 4] : vector<1x2x2x16x16xf32> to vector<1xf32>
    %15 = vector.shape_cast %14 : vector<1xf32> to vector<1x1x1x1x1xf32>
    %16 = vector.extract %15[0, 0, 0, 0, 0] : f32 from vector<1x1x1x1x1xf32>
    %cst_12 = arith.constant 2.000000e+00 : f32
    %17 = arith.mulf %cst_12, %16 : f32
    %18 = vector.broadcast %12 : f32 to vector<1x1x1x1xf32>
    %c0_13 = arith.constant 0 : index
    %c0_14 = arith.constant 0 : index
    %c0_15 = arith.constant 0 : index
    %c0_16 = arith.constant 0 : index
    %19 = vector.load %arg5[%c0_13, %c0_14, %c0_15, %c0_16] : memref<1x1x1x1xf32, #tpu.memory_space<vmem>>, vector<1x1x1x1xf32>
    tpu.vector_store %arg5[%c0_13, %c0_14, %c0_15, %c0_16], %18 {strides = array<i32>} : memref<1x1x1x1xf32, #tpu.memory_space<vmem>>, vector<1x1x1x1xf32>,
    %20 = vector.broadcast %17 : f32 to vector<1x1x1x1xf32>
    %c0_17 = arith.constant 0 : index
    %c0_18 = arith.constant 0 : index
    %c0_19 = arith.constant 0 : index
    %c0_20 = arith.constant 0 : index
    %21 = vector.load %arg6[%c0_17, %c0_18, %c0_19, %c0_20] : memref<1x1x1x1xf32, #tpu.memory_space<vmem>>, vector<1x1x1x1xf32>
    tpu.vector_store %arg6[%c0_17, %c0_18, %c0_19, %c0_20], %20 {strides = array<i32>} : memref<1x1x1x1xf32, #tpu.memory_space<vmem>>, vector<1x1x1x1xf32>,
    return
  }
  func.func @transform_0(%arg0: i32, %arg1: i32) -> (i32, i32, i32, i32) {
    %c0_i32 = arith.constant 0 : i32
    %c0_i32_0 = arith.constant 0 : i32
    %c0_i32_1 = arith.constant 0 : i32
    return %arg0, %c0_i32, %arg1, %c0_i32_0 : i32, i32, i32, i32
  }
  func.func @transform_1(%arg0: i32, %arg1: i32) -> (i32, i32, i32, i32) {
    %c0_i32 = arith.constant 0 : i32
    %c0_i32_0 = arith.constant 0 : i32
    %c0_i32_1 = arith.constant 0 : i32
    return %arg0, %c0_i32, %arg1, %c0_i32_0 : i32, i32, i32, i32
  }
  func.func @transform_2(%arg0: i32, %arg1: i32) -> (i32, i32, i32, i32) {
    %c0_i32 = arith.constant 0 : i32
    %c0_i32_0 = arith.constant 0 : i32
    %c0_i32_1 = arith.constant 0 : i32
    return %arg0, %c0_i32, %arg1, %c0_i32_0 : i32, i32, i32, i32
  }
  func.func @transform_3(%arg0: i32, %arg1: i32) -> (i32, i32, i32, i32) {
    %c0_i32 = arith.constant 0 : i32
    %c0_i32_0 = arith.constant 0 : i32
    %c0_i32_1 = arith.constant 0 : i32
    return %arg0, %arg1, %c0_i32, %c0_i32_0 : i32, i32, i32, i32
  }
  func.func @transform_4(%arg0: i32, %arg1: i32) -> (i32, i32, i32, i32) {
    %c0_i32 = arith.constant 0 : i32
    %c0_i32_0 = arith.constant 0 : i32
    %c0_i32_1 = arith.constant 0 : i32
    return %arg0, %arg1, %c0_i32, %c0_i32_0 : i32, i32, i32, i32
  }
}

</mosaic_0001>

<llo_original>
// kernel: tpu_custom_call.1
$region0: #{tpu_custom_call.1}
  #allocation0 [shape = 'u32[]', space=smem, size = 0x4, offset = 0x4, fixed_abs, tag = 'smem constant byte address 0x4 - core index']
  #allocation1 [shape = 'u32[144,128]{1,0:T(1,128)}', space=vmem, size = 0x12000, scoped, tag = 'internal scratch']
  %s0 = inlined_call_operand.hbm [shape: f32[2,4,16,16], index: 0, kind: input, shape index: {}]
  %s1 = inlined_call_operand.hbm [shape: f32[2,4,16,16], index: 1, kind: input, shape index: {}]
  %s2 = inlined_call_operand.hbm [shape: f32[2,2,16,16], index: 2, kind: input, shape index: {}]
  %s3 = inlined_call_operand.hbm [shape: f32[1,1,1,1], index: 3, kind: output, shape index: {0}]
  %s4 = inlined_call_operand.hbm [shape: f32[1,1,1,1], index: 4, kind: output, shape index: {1}]
  %5 = xla_tuple %s3, %s4
  %s6 = sld [smem:[#allocation0]]
  $region42: #{tpu_custom_call.1} parent=0
    _
  %s8 = ssub.s32 1, %s6
  %s9 = scalar_select 0, %s8, %s6
  $region1: #{tpu_custom_call.1} parent=0
    #allocation2 [shape = 'u8[65536]{0}', space=vmem, size = 0x10000, scoped, tag = 'input window, operand 0, single buffered']
    #allocation3 [shape = 's32[1]{0}', space=sflag, size = 0x4, scoped, tag = 'scoped memory for tpu_custom_call.1']
    #allocation4 [shape = 's32[1]{0}', space=sflag, size = 0x4, scoped, tag = 'scoped memory for tpu_custom_call.1']
    #allocation5 [shape = 'u8[65536]{0}', space=vmem, size = 0x10000, scoped, tag = 'input window, operand 1, single buffered']
    #allocation6 [shape = 's32[1]{0}', space=sflag, size = 0x4, scoped, tag = 'scoped memory for tpu_custom_call.1']
    #allocation7 [shape = 'u8[32768]{0}', space=vmem, size = 0x8000, scoped, tag = 'input window, operand 2, single buffered']
    #allocation8 [shape = 'u8[512]{0}', space=vmem, size = 0x400, scoped, tag = 'output window, operand 0, single buffered']
    #allocation9 [shape = 'u8[512]{0}', space=vmem, size = 0x400, scoped, tag = 'output window, operand 1, single buffered']
    #allocation10 [shape = 's32[1]{0}', space=sflag, size = 0x4, scoped, tag = 'scoped memory for tpu_custom_call.1']
    %10 = vsyncpa [#allocation3], 0
    %11 = vsyncpa [#allocation6], 0
    %12 = vsyncpa [#allocation4], 0
    %13 = vsyncpa [#allocation10], 0
    // Predicated region
    $region2: #{tpu_custom_call.1} parent=1 // pred_check
      _
    $region3: #{tpu_custom_call.1} parent=1 // pred_check_branch
      %15 = sbr.rel (0) target = $region5
    $region4: #{tpu_custom_call.1} parent=1 // pred_region
      %s17 = ssub.s32 2048, 2048
      %18 = vsyncadd [#allocation3], %s17
      %s19 = sshll.u32 [#allocation2], 4
      %s20 = int_to_ptr.vmem [resolvable:$true] %s19
      %25 = dma.hbm_to_vmem [thread:$0]  %s0, 2048, %s20, [#allocation3], 128, 128, 8
    $region5: #{tpu_custom_call.1} parent=1 // pred_fallthru
      _
    // Predicated region
    $region6: #{tpu_custom_call.1} parent=1 // pred_check
      _
    $region7: #{tpu_custom_call.1} parent=1 // pred_check_branch
      %27 = sbr.rel (0) target = $region9
    $region8: #{tpu_custom_call.1} parent=1 // pred_region
      %s29 = ssub.s32 2048, 2048
      %30 = vsyncadd [#allocation6], %s29
      %s31 = sshll.u32 [#allocation5], 4
      %s32 = int_to_ptr.vmem [resolvable:$true] %s31
      %37 = dma.hbm_to_vmem [thread:$0]  %s1, 2048, %s32, [#allocation6], 128, 128, 8
    $region9: #{tpu_custom_call.1} parent=1 // pred_fallthru
      _
    // Predicated region
    $region10: #{tpu_custom_call.1} parent=1 // pred_check
      _
    $region11: #{tpu_custom_call.1} parent=1 // pred_check_branch
      %39 = sbr.rel (0) target = $region13
    $region12: #{tpu_custom_call.1} parent=1 // pred_region
      %s41 = ssub.s32 1024, 1024
      %42 = vsyncadd [#allocation6], %s41
      %s43 = sshll.u32 [#allocation7], 4
      %s44 = int_to_ptr.vmem [resolvable:$true] %s43
      %49 = dma.hbm_to_vmem [thread:$0]  %s2, 1024, %s44, [#allocation6], 128, 128, 8
    $region13: #{tpu_custom_call.1} parent=1 // pred_fallthru
      _
    // Predicated region
    $region14: #{tpu_custom_call.1} parent=1 // pred_check
      _
    $region15: #{tpu_custom_call.1} parent=1 // pred_check_branch
      %51 = sbr.rel (0) target = $region17
    $region16: #{tpu_custom_call.1} parent=1 // pred_region
      %52 = dma.done [#allocation3], 2048
    $region17: #{tpu_custom_call.1} parent=1 // pred_fallthru
      _
    // Predicated region
    $region18: #{tpu_custom_call.1} parent=1 // pred_check
      _
    $region19: #{tpu_custom_call.1} parent=1 // pred_check_branch
      %54 = sbr.rel (0) target = $region21
    $region20: #{tpu_custom_call.1} parent=1 // pred_region
      %55 = dma.done [#allocation6], 2048
    $region21: #{tpu_custom_call.1} parent=1 // pred_fallthru
      _
    // Predicated region
    $region22: #{tpu_custom_call.1} parent=1 // pred_check
      _
    $region23: #{tpu_custom_call.1} parent=1 // pred_check_branch
      %57 = sbr.rel (0) target = $region25
    $region24: #{tpu_custom_call.1} parent=1 // pred_region
      %58 = dma.done [#allocation6], 1024
    $region25: #{tpu_custom_call.1} parent=1 // pred_fallthru
      _
    %v59 = vld [vmem:[#allocation2] sm:$0xff]
    %v60 = vld [vmem:[#allocation2 + $0x8] sm:$0xff]
    %v61 = vld [vmem:[#allocation2 + $0x10] sm:$0xff]
    %v62 = vld [vmem:[#allocation2 + $0x18] sm:$0xff]
    %v63 = vld [vmem:[#allocation2 + $0x20] sm:$0xff]
    %v64 = vld [vmem:[#allocation2 + $0x28] sm:$0xff]
    %v65 = vld [vmem:[#allocation2 + $0x30] sm:$0xff]
    %v66 = vld [vmem:[#allocation2 + $0x38] sm:$0xff]
    %v67 = vld [vmem:[#allocation2 + $0x40] sm:$0xff]
    %v68 = vld [vmem:[#allocation2 + $0x48] sm:$0xff]
    %v69 = vld [vmem:[#allocation2 + $0x50] sm:$0xff]
    %v70 = vld [vmem:[#allocation2 + $0x58] sm:$0xff]
    %v71 = vld [vmem:[#allocation2 + $0x60] sm:$0xff]
    %v72 = vld [vmem:[#allocation2 + $0x68] sm:$0xff]
    %v73 = vld [vmem:[#allocation2 + $0x70] sm:$0xff]
    %v74 = vld [vmem:[#allocation2 + $0x78] sm:$0xff]
    %v75 = vld [vmem:[#allocation5] sm:$0xff]
    %v76 = vld [vmem:[#allocation5 + $0x8] sm:$0xff]
    %v77 = vld [vmem:[#allocation5 + $0x10] sm:$0xff]
    %v78 = vld [vmem:[#allocation5 + $0x18] sm:$0xff]
    %v79 = vld [vmem:[#allocation5 + $0x20] sm:$0xff]
    %v80 = vld [vmem:[#allocation5 + $0x28] sm:$0xff]
    %v81 = vld [vmem:[#allocation5 + $0x30] sm:$0xff]
    %v82 = vld [vmem:[#allocation5 + $0x38] sm:$0xff]
    %v83 = vld [vmem:[#allocation5 + $0x40] sm:$0xff]
    %v84 = vld [vmem:[#allocation5 + $0x48] sm:$0xff]
    %v85 = vld [vmem:[#allocation5 + $0x50] sm:$0xff]
    %v86 = vld [vmem:[#allocation5 + $0x58] sm:$0xff]
    %v87 = vld [vmem:[#allocation5 + $0x60] sm:$0xff]
    %v88 = vld [vmem:[#allocation5 + $0x68] sm:$0xff]
    %v89 = vld [vmem:[#allocation5 + $0x70] sm:$0xff]
    %v90 = vld [vmem:[#allocation5 + $0x78] sm:$0xff]
    %v91 = vld [vmem:[#allocation7] sm:$0xff]
    %v92 = vld [vmem:[#allocation7 + $0x8] sm:$0xff]
    %v93 = vld [vmem:[#allocation7 + $0x10] sm:$0xff]
    %v94 = vld [vmem:[#allocation7 + $0x18] sm:$0xff]
    %v95 = vld [vmem:[#allocation7 + $0x20] sm:$0xff]
    %v96 = vld [vmem:[#allocation7 + $0x28] sm:$0xff]
    %v97 = vld [vmem:[#allocation7 + $0x30] sm:$0xff]
    %v98 = vld [vmem:[#allocation7 + $0x38] sm:$0xff]
    %v99 = vsub.f32 %v75, %v59
    %v100 = vsub.f32 %v76, %v60
    %v101 = vsub.f32 %v77, %v61
    %v102 = vsub.f32 %v78, %v62
    %v103 = vsub.f32 %v79, %v63
    %v104 = vsub.f32 %v80, %v64
    %v105 = vsub.f32 %v81, %v65
    %v106 = vsub.f32 %v82, %v66
    %v107 = vsub.f32 %v83, %v67
    %v108 = vsub.f32 %v84, %v68
    %v109 = vsub.f32 %v85, %v69
    %v110 = vsub.f32 %v86, %v70
    %v111 = vsub.f32 %v87, %v71
    %v112 = vsub.f32 %v88, %v72
    %v113 = vsub.f32 %v89, %v73
    %v114 = vsub.f32 %v90, %v74
    %v115 = vmul.f32 %v99, %v99
    %v116 = vmul.f32 %v100, %v100
    %v117 = vmul.f32 %v101, %v101
    %v118 = vmul.f32 %v102, %v102
    %v119 = vmul.f32 %v103, %v103
    %v120 = vmul.f32 %v104, %v104
    %v121 = vmul.f32 %v105, %v105
    %v122 = vmul.f32 %v106, %v106
    %v123 = vmul.f32 %v107, %v107
    %v124 = vmul.f32 %v108, %v108
    %v125 = vmul.f32 %v109, %v109
    %v126 = vmul.f32 %v110, %v110
    %v127 = vmul.f32 %v111, %v111
    %v128 = vmul.f32 %v112, %v112
    %v129 = vmul.f32 %v113, %v113
    %v130 = vmul.f32 %v114, %v114
    %v131 = vadd.f32 %v115, %v119
    %v132 = vadd.f32 %v116, %v120
    %v133 = vadd.f32 %v117, %v121
    %v134 = vadd.f32 %v118, %v122
    %v135 = vadd.f32 %v123, %v127
    %v136 = vadd.f32 %v124, %v128
    %v137 = vadd.f32 %v125, %v129
    %v138 = vadd.f32 %v126, %v130
    %v139 = vmul.f32 %v91, %v131
    %v140 = vmul.f32 %v92, %v132
    %v141 = vmul.f32 %v93, %v133
    %v142 = vmul.f32 %v94, %v134
    %v143 = vmul.f32 %v95, %v135
    %v144 = vmul.f32 %v96, %v136
    %v145 = vmul.f32 %v97, %v137
    %v146 = vmul.f32 %v98, %v138
    %vm147 = vcmask 130048
    %v148 = vsel %vm147, %v139, 0.0
    %v149 = vsel %vm147, %v140, 0.0
    %v150 = vadd.f32 %v148, %v149
    %v151 = vsel %vm147, %v141, 0.0
    %v152 = vadd.f32 %v150, %v151
    %v153 = vsel %vm147, %v142, 0.0
    %v154 = vadd.f32 %v152, %v153
    %v155 = vsel %vm147, %v143, 0.0
    %v156 = vadd.f32 %v154, %v155
    %v157 = vsel %vm147, %v144, 0.0
    %v158 = vadd.f32 %v156, %v157
    %v159 = vsel %vm147, %v145, 0.0
    %v160 = vadd.f32 %v158, %v159
    %v161 = vsel %vm147, %v146, 0.0
    %v162 = vadd.f32 %v160, %v161
    %163 = vadd.xlane.f32.xlu0 %v162
    %v164 = vpop.xlane.xlu0 %163
    %v165 = vrot.slane %v164, 4
    %v166 = vadd.f32 %v164, %v165
    %v167 = vrot.slane %v166, 2
    %v168 = vadd.f32 %v166, %v167
    %v169 = vrot.slane %v168, 1
    %v170 = vadd.f32 %v168, %v169
    %s171 = vtos %v170
    %v172 = vsel %vm147, %v91, 0.0
    %v173 = vsel %vm147, %v92, 0.0
    %v174 = vadd.f32 %v172, %v173
    %v175 = vsel %vm147, %v93, 0.0
    %v176 = vadd.f32 %v174, %v175
    %v177 = vsel %vm147, %v94, 0.0
    %v178 = vadd.f32 %v176, %v177
    %v179 = vsel %vm147, %v95, 0.0
    %v180 = vadd.f32 %v178, %v179
    %v181 = vsel %vm147, %v96, 0.0
    %v182 = vadd.f32 %v180, %v181
    %v183 = vsel %vm147, %v97, 0.0
    %v184 = vadd.f32 %v182, %v183
    %v185 = vsel %vm147, %v98, 0.0
    %v186 = vadd.f32 %v184, %v185
    %187 = vadd.xlane.f32.xlu0 %v186
    %v188 = vpop.xlane.xlu0 %187
    %v189 = vrot.slane %v188, 4
    %v190 = vadd.f32 %v188, %v189
    %v191 = vrot.slane %v190, 2
    %v192 = vadd.f32 %v190, %v191
    %v193 = vrot.slane %v192, 1
    %v194 = vadd.f32 %v192, %v193
    %s195 = vtos %v194
    %s196 = smul.f32 %s195, 2.0
    %v197 = vstv %s171
    %vm198 = vcmask 0
    %199 = vst.msk [vmem:[#allocation8] sm:$0x1] %vm198, %v197
    %v200 = vstv %s196
    %201 = vst.msk [vmem:[#allocation9] sm:$0x1] %vm198, %v200
    // Predicated region
    $region26: #{tpu_custom_call.1} parent=1 // pred_check
      _
    $region27: #{tpu_custom_call.1} parent=1 // pred_check_branch
      %203 = sbr.rel (0) target = $region29
    $region28: #{tpu_custom_call.1} parent=1 // pred_region
      %s205 = ssub.s32 16, 16
      %206 = vsyncadd [#allocation4], %s205
      %s208 = sshll.u32 [#allocation8], 4
      %s209 = int_to_ptr.vmem [resolvable:$true] %s208
      %211 = dma.vmem_to_hbm [thread:$0]  %s209, 16, %s3, [#allocation4]
    $region29: #{tpu_custom_call.1} parent=1 // pred_fallthru
      _
    // Predicated region
    $region30: #{tpu_custom_call.1} parent=1 // pred_check
      _
    $region31: #{tpu_custom_call.1} parent=1 // pred_check_branch
      %213 = sbr.rel (0) target = $region33
    $region32: #{tpu_custom_call.1} parent=1 // pred_region
      %s215 = ssub.s32 16, 16
      %216 = vsyncadd [#allocation10], %s215
      %s218 = sshll.u32 [#allocation9], 4
      %s219 = int_to_ptr.vmem [resolvable:$true] %s218
      %221 = dma.vmem_to_hbm [thread:$0]  %s219, 16, %s4, [#allocation10]
    $region33: #{tpu_custom_call.1} parent=1 // pred_fallthru
      _
    // Predicated region
    $region34: #{tpu_custom_call.1} parent=1 // pred_check
      _
    $region35: #{tpu_custom_call.1} parent=1 // pred_check_branch
      %223 = sbr.rel (0) target = $region37
    $region36: #{tpu_custom_call.1} parent=1 // pred_region
      %224 = dma.done [#allocation4], 16
    $region37: #{tpu_custom_call.1} parent=1 // pred_fallthru
      _
    // Predicated region
    $region38: #{tpu_custom_call.1} parent=1 // pred_check
      _
    $region39: #{tpu_custom_call.1} parent=1 // pred_check_branch
      %226 = sbr.rel (0) target = $region41
    $region40: #{tpu_custom_call.1} parent=1 // pred_region
      %227 = dma.done [#allocation10], 16
    $region41: #{tpu_custom_call.1} parent=1 // pred_fallthru
      _
    %228 = vsyncpa [#allocation3], 1
    %229 = vsyncpa [#allocation6], 1
    %230 = vsyncpa [#allocation4], 1
    %231 = vsyncpa [#allocation10], 1

</llo_original>
